<compile_context>
chip_gen: v5e
topology: v5e:2x2
jax: 0.10.0
libtpu: 0.0.40
codegen_flags: <defaults>
</compile_context>

<pallas_src>
import jax
import jax.numpy as jnp
import numpy as np
from jax.experimental import pallas as pl
from jax.experimental.pallas import tpu as pltpu


def _round_up(x, m):
    return ((x + m - 1) // m) * m


def _sublane_multiple(dtype):
    # native sublane tile: 8 for 4-byte, 16 for 2-byte, 32 for 1-byte dtypes
    return max(8, 32 // jnp.dtype(dtype).itemsize)


def _vmem_limit_bytes(tb, ha, d, l_pad, mxu_itemsize, logits_itemsize):
    """Rough VMEM budget: BlockSpec buffers (double-buffered) + f32 temps."""
    buffered = 2 * (tb * ha * mxu_itemsize            # audio tile
                    + l_pad * d * mxu_itemsize        # resident t_norm
                    + ha * d * mxu_itemsize           # resident w_audio
                    + d * 4                           # bias
                    + tb * 4                          # targets
                    + tb * l_pad * logits_itemsize    # logits tile (out)
                    + tb * 128 * 4)                   # nll slab (out)
    interm = 4 * (2 * tb * d + 3 * tb * l_pad)        # a, logits, exp temps
    est = buffered + interm
    # >= 32 MiB scoped default, never above v7x's 64 MiB physical VMEM.
    return int(min(max(32 * 1024 * 1024, 2 * est), 64 * 1024 * 1024))


# ---------------------------------------------------------------------------
# One-shot text-branch kernel: t_norm = L2-normalize(xt @ wt + bt)
# ---------------------------------------------------------------------------
def clap_text_embed_kernel(xt_ref, wt_ref, bt_ref, t_ref):
    t = jnp.dot(xt_ref[...], wt_ref[...], preferred_element_type=jnp.float32)
    t = t + bt_ref[...]
    # F.normalize clamps ||x|| at eps; adding eps^2 inside rsqrt is numerically
    # equivalent at this scale and keeps zero (padded) rows NaN-free.
    t = t * jax.lax.rsqrt(jnp.sum(t * t, axis=-1, keepdims=True) + 1e-12)
    t_ref[...] = t.astype(t_ref.dtype)


# ---------------------------------------------------------------------------
# Per-batch-tile kernel: audio projection -> norm -> scaled similarity -> NLL
# ---------------------------------------------------------------------------
def clap_sim_ce_kernel(nrows_ref, nlab_ref, scale_ref,
                       xa_ref, tnorm_ref, wa_ref, ba_ref, y_ref,
                       logits_ref, nll_ref):
    """
    nrows_ref  : (1, 1) i32 SMEM   true batch size B
    nlab_ref   : (1, 1) i32 SMEM   true number of labels L
    scale_ref  : (1, 1) f32 SMEM   exp(logit_scale_a)
    xa_ref     : (tb, Ha)          pooled audio features (batch tile)
    tnorm_ref  : (Lp, D)           precomputed normalized text embeddings
    wa_ref     : (Ha, D)           audio projection weight (resident)
    ba_ref     : (1,  D)  f32      audio projection bias
    y_ref      : (tb, 1)  i32      integer class targets (must satisfy y < L)
    logits_ref : (tb, Lp)          logits_per_audio tile              [out]
    nll_ref    : (tb, 128) f32     per-row NLL broadcast over lanes   [out]
    """
    f32 = jnp.float32

    # --- audio projection (MXU, f32 accumulation) ----------------------------
    a = jnp.dot(xa_ref[...], wa_ref[...], preferred_element_type=f32) + ba_ref[...]

    # --- L2 normalize; fold exp(logit_scale_a) into the (tb,1) inverse norm --
    inv = scale_ref[0, 0] * jax.lax.rsqrt(
        jnp.sum(a * a, axis=-1, keepdims=True) + 1e-12)
    a = a * inv

    # --- similarity: contract last dims (no transpose), mxu-dtype operands ---
    a_mm = a.astype(tnorm_ref.dtype)
    logits = jax.lax.dot_general(
        a_mm, tnorm_ref[...], dimension_numbers=(((1,), (1,)), ((), ())),
        preferred_element_type=f32)
    logits_ref[...] = logits.astype(logits_ref.dtype)

    # --- cross entropy (per-row NLL, f32), masking padded label columns ------
    tb, lp = logits.shape
    lab_ids = jax.lax.broadcasted_iota(jnp.int32, (tb, lp), 1)
    col_valid = lab_ids < nlab_ref[0, 0]
    ce_logits = jnp.where(col_valid, logits, -1e30)

    m = jnp.max(ce_logits, axis=-1, keepdims=True)                       # (tb,1)
    lse = m + jnp.log(jnp.sum(jnp.exp(ce_logits - m), axis=-1, keepdims=True))
    onehot = lab_ids == y_ref[...]                                       # (tb,lp)
    correct = jnp.sum(jnp.where(onehot, logits, 0.0), axis=-1, keepdims=True)

    row_ids = (pl.program_id(0) * tb
               + jax.lax.broadcasted_iota(jnp.int32, (tb, 1), 0))
    row_valid = row_ids < nrows_ref[0, 0]
    nll_row = jnp.where(row_valid, lse - correct, 0.0)                   # (tb,1)
    nll_ref[...] = jnp.broadcast_to(nll_row, nll_ref.shape)              # lane-dense


# ---------------------------------------------------------------------------
# Wrapper
# ---------------------------------------------------------------------------
def clap_zeroshot_forward(audio_feats, text_feats, params, y, *,
                          block_b=256, mxu_dtype=jnp.bfloat16,
                          logits_dtype=jnp.float32):
    """Returns (loss, logits_per_audio) — same tuple order as the PyTorch module."""
    B, Ha = audio_feats.shape
    L, Ht = text_feats.shape
    D = params["w_audio"].shape[1]

    sub = _sublane_multiple(mxu_dtype)
    tb = min(_round_up(max(block_b, sub), sub), _round_up(B, sub))  # batch tile
    nb = pl.cdiv(B, tb)                                             # ragged last tile OK
    l_pad = _round_up(L, 128)                                       # lane-dense labels
    b_out = nb * tb                                                 # padded output rows

    mxu_isz = jnp.dtype(mxu_dtype).itemsize
    log_isz = jnp.dtype(logits_dtype).itemsize

    # dtype casts only — no batch padding copy of the audio features / targets
    xa = audio_feats.astype(mxu_dtype)
    y2 = y.astype(jnp.int32).reshape(B, 1)

    wa = params["w_audio"].astype(mxu_dtype)
    ba = params["b_audio"].astype(jnp.float32).reshape(1, D)
    wt = params["w_text"].astype(mxu_dtype)
    bt = params["b_text"].astype(jnp.float32).reshape(1, D)

    # --- text branch: computed once (hoisted out of the batch grid) ----------
    xt_pad = jnp.zeros((l_pad, Ht), mxu_dtype).at[:L].set(text_feats.astype(mxu_dtype))
    t_norm = pl.pallas_call(
        clap_text_embed_kernel,
        out_shape=jax.ShapeDtypeStruct((l_pad, D), mxu_dtype),
    )(xt_pad, wt, bt)

    scale = jnp.exp(params["log_logit_scale_a"]).astype(jnp.float32).reshape(1, 1)
    n_rows = jnp.array([[B]], dtype=jnp.int32)
    n_labels = jnp.array([[L]], dtype=jnp.int32)

    logits_pad, nll = pl.pallas_call(
        clap_sim_ce_kernel,
        grid=(nb,),
        in_specs=[
            pl.BlockSpec(memory_space=pltpu.SMEM),             # n_rows
            pl.BlockSpec(memory_space=pltpu.SMEM),             # n_labels
            pl.BlockSpec(memory_space=pltpu.SMEM),             # scale
            pl.BlockSpec((tb, Ha), lambda i: (i, 0)),           # audio feats tile
            pl.BlockSpec((l_pad, D), lambda i: (0, 0)),         # t_norm (resident)
            pl.BlockSpec((Ha, D), lambda i: (0, 0)),            # w_audio (resident)
            pl.BlockSpec((1, D), lambda i: (0, 0)),             # b_audio
            pl.BlockSpec((tb, 1), lambda i: (i, 0)),            # y tile
        ],
        out_specs=(
            pl.BlockSpec((tb, l_pad), lambda i: (i, 0)),        # logits tile
            pl.BlockSpec((tb, 128), lambda i: (i, 0)),          # NLL slab (lane-dense)
        ),
        out_shape=(
            jax.ShapeDtypeStruct((b_out, l_pad), logits_dtype),
            jax.ShapeDtypeStruct((b_out, 128), jnp.float32),
        ),
        compiler_params=pltpu.CompilerParams(
            dimension_semantics=("parallel",),                  # megacore over tiles
            vmem_limit_bytes=_vmem_limit_bytes(tb, Ha, D, l_pad, mxu_isz, log_isz),
        ),
    )(n_rows, n_labels, scale, xa, t_norm, wa, ba, y2)

    # rows >= B were zeroed in-kernel by row_valid, so a plain sum is exact
    loss = jnp.sum(nll[:, 0]) / B
    return loss, logits_pad[:B, :L]


# ---------------------------------------------------------------------------
# Pure-JAX reference
# ---------------------------------------------------------------------------
def _reference(audio_feats, text_feats, params, y):
    a = audio_feats @ params["w_audio"] + params["b_audio"]
    t = text_feats @ params["w_text"] + params["b_text"]
    a = a / jnp.linalg.norm(a, axis=-1, keepdims=True)
    t = t / jnp.linalg.norm(t, axis=-1, keepdims=True)
    logits = jnp.exp(params["log_logit_scale_a"]) * (a @ t.T)
    lse = jax.nn.logsumexp(logits, axis=-1)
    correct = jnp.take_along_axis(logits, y[:, None], axis=-1)[:, 0]
    return jnp.mean(lse - correct), logits


if __name__ == "__main__":
    # Small CLAP-flavoured shapes: 8 audio clips, 8 candidate labels,
    # 128-dim pooled encoder features, 128-dim shared projection space.
    B, L, H_AUDIO, H_TEXT, D = 8, 8, 128, 128, 128

    key = jax.random.PRNGKey(0)
    k1, k2, k3, k4, k5, k6 = jax.random.split(key, 6)

    audio_feats = jax.random.normal(k1, (B, H_AUDIO), dtype=jnp.float32)
    text_feats = jax.random.normal(k2, (L, H_TEXT), dtype=jnp.float32)
    y = jnp.arange(B, dtype=jnp.int32) % L

    params = {
        "w_audio": 0.05 * jax.random.normal(k3, (H_AUDIO, D), dtype=jnp.float32),
        "b_audio": 0.01 * jax.random.normal(k4, (1, D), dtype=jnp.float32),
        "w_text": 0.05 * jax.random.normal(k5, (H_TEXT, D), dtype=jnp.float32),
        "b_text": 0.01 * jax.random.normal(k6, (1, D), dtype=jnp.float32),
        # CLAP initializes logit_scale to log(1/0.07)
        "log_logit_scale_a": jnp.asarray(np.log(1.0 / 0.07), dtype=jnp.float32),
    }

    ref_loss, ref_logits = _reference(audio_feats, text_feats, params, y)

    # 1) f32 MXU path (tight check)
    loss32, logits32 = clap_zeroshot_forward(audio_feats, text_feats, params, y,
                                             mxu_dtype=jnp.float32)
    jax.block_until_ready((loss32, logits32))
    np.testing.assert_allclose(np.asarray(logits32), np.asarray(ref_logits),
                               rtol=2e-2, atol=2e-2)
    np.testing.assert_allclose(np.asarray(loss32), np.asarray(ref_loss),
                               rtol=2e-2, atol=2e-2)

    # 2) bf16 MXU path (projection + similarity on the native bf16 MXU),
    #    f32 accumulation / norm / CE, f32 logits writeback
    loss16, logits16 = clap_zeroshot_forward(audio_feats, text_feats, params, y,
                                             mxu_dtype=jnp.bfloat16)
    jax.block_until_ready((loss16, logits16))
    np.testing.assert_allclose(np.asarray(logits16), np.asarray(ref_logits),
                               rtol=5e-2, atol=8e-2)
    np.testing.assert_allclose(np.asarray(loss16), np.asarray(ref_loss),
                               rtol=5e-2, atol=8e-2)

    # 3) bf16 logits writeback (loss-only / argmax consumers); loss stays f32
    loss16b, logits16b = clap_zeroshot_forward(audio_feats, text_feats, params, y,
                                               mxu_dtype=jnp.bfloat16,
                                               logits_dtype=jnp.bfloat16)
    jax.block_until_ready((loss16b, logits16b))
    np.testing.assert_allclose(np.asarray(logits16b, dtype=np.float32),
                               np.asarray(ref_logits), rtol=1e-1, atol=1e-1)
    np.testing.assert_allclose(np.asarray(loss16b), np.asarray(ref_loss),
                               rtol=5e-2, atol=8e-2)

    # 4) multi-tile batch grid + ragged (unpadded) last tile + ragged labels
    B2, L2 = 20, 5
    ka, kt, ky = jax.random.split(jax.random.PRNGKey(1), 3)
    a2 = jax.random.normal(ka, (B2, H_AUDIO), dtype=jnp.float32)
    t2 = jax.random.normal(kt, (L2, H_TEXT), dtype=jnp.float32)
    y2 = jax.random.randint(ky, (B2,), 0, L2, dtype=jnp.int32)
    loss2, logits2 = clap_zeroshot_forward(a2, t2, params, y2,
                                           block_b=8, mxu_dtype=jnp.float32)
    jax.block_until_ready((loss2, logits2))
    rl2, rg2 = _reference(a2, t2, params, y2)
    np.testing.assert_allclose(np.asarray(logits2), np.asarray(rg2),
                               rtol=2e-2, atol=2e-2)
    np.testing.assert_allclose(np.asarray(loss2), np.asarray(rl2),
                               rtol=2e-2, atol=2e-2)

    print("KERNEL_OK")
</pallas_src>

<mosaic_0001>
module attributes {stable_mosaic.version = 11 : i64} {
  func.func @clap_text_embed_kernel(%arg0: memref<128x128xf32, #tpu.memory_space<vmem>>, %arg1: memref<128x128xf32, #tpu.memory_space<vmem>>, %arg2: memref<1x128xf32, #tpu.memory_space<vmem>>, %arg3: memref<128x128xf32, #tpu.memory_space<vmem>>) attributes {dimension_semantics = [], scalar_prefetch = 0 : i64, scratch_operands = 0 : i64, tpu.core_type = #tpu.core_type<tc>} {
    %c0 = arith.constant 0 : index
    %c0_0 = arith.constant 0 : index
    %0 = vector.load %arg0[%c0, %c0_0] : memref<128x128xf32, #tpu.memory_space<vmem>>, vector<128x128xf32>
    %c0_1 = arith.constant 0 : index
    %c0_2 = arith.constant 0 : index
    %1 = vector.load %arg1[%c0_1, %c0_2] : memref<128x128xf32, #tpu.memory_space<vmem>>, vector<128x128xf32>
    %cst = arith.constant dense<0.000000e+00> : vector<128x128xf32>
    %2 = tpu.matmul %0, %1, %cst {dimension_numbers = #tpu.dot_dimension_numbers<[1], [0], [0], [1], [0, 0, 1, 1], [], []>} : vector<128x128xf32>, vector<128x128xf32>, vector<128x128xf32> -> vector<128x128xf32>
    %c0_3 = arith.constant 0 : index
    %c0_4 = arith.constant 0 : index
    %3 = vector.load %arg2[%c0_3, %c0_4] : memref<1x128xf32, #tpu.memory_space<vmem>>, vector<1x128xf32>
    %4 = vector.broadcast %3 : vector<1x128xf32> to vector<128x128xf32>
    %5 = arith.addf %2, %4 : vector<128x128xf32>
    %6 = arith.mulf %5, %5 : vector<128x128xf32>
    %cst_5 = arith.constant dense<0.000000e+00> : vector<128xf32>
    %7 = vector.multi_reduction <add>, %6, %cst_5 [1] : vector<128x128xf32> to vector<128xf32>
    %8 = vector.shape_cast %7 : vector<128xf32> to vector<128x1xf32>
    %cst_6 = arith.constant 9.99999996E-13 : f32
    %9 = vector.broadcast %cst_6 : f32 to vector<128x1xf32>
    %10 = arith.addf %8, %9 : vector<128x1xf32>
    %11 = math.rsqrt %10 : vector<128x1xf32>
    %12 = vector.broadcast %11 : vector<128x1xf32> to vector<128x128xf32>
    %13 = arith.mulf %5, %12 : vector<128x128xf32>
    %c0_7 = arith.constant 0 : index
    %c0_8 = arith.constant 0 : index
    %14 = vector.load %arg3[%c0_7, %c0_8] : memref<128x128xf32, #tpu.memory_space<vmem>>, vector<128x128xf32>
    tpu.vector_store %arg3[%c0_7, %c0_8], %13 {strides = array<i32>} : memref<128x128xf32, #tpu.memory_space<vmem>>, vector<128x128xf32>,
    return
  }
}

</mosaic_0001>

<llo_original>
// kernel: tpu_custom_call.1
$region0: #{tpu_custom_call.1}
  #allocation0 [shape = 'u32[]', space=smem, size = 0x4, offset = 0x4, fixed_abs, tag = 'smem constant byte address 0x4 - core index']
  #allocation1 [shape = 'u32[72,128]{1,0:T(1,128)}', space=vmem, size = 0x9000, scoped, tag = 'internal scratch']
  %s0 = inlined_call_operand.hbm [shape: f32[128,128], index: 0, kind: input, shape index: {}]
  %s1 = inlined_call_operand.hbm [shape: f32[128,128], index: 1, kind: input, shape index: {}]
  %s2 = inlined_call_operand.vmem [shape: f32[1,128], index: 2, kind: input, shape index: {}]
  %s3 = inlined_call_operand.hbm [shape: f32[128,128], index: 3, kind: output, shape index: {}]
  %s4 = sld [smem:[#allocation0]]
  $region30: #{tpu_custom_call.1} parent=0
    _
  %s6 = ssub.s32 1, %s4
  %s7 = scalar_select 0, %s6, %s4
  $region1: #{tpu_custom_call.1} parent=0
    #allocation2 [shape = 'u8[65536]{0}', space=vmem, size = 0x10000, scoped, tag = 'input window, operand 0, single buffered']
    #allocation3 [shape = 's32[1]{0}', space=sflag, size = 0x4, scoped, tag = 'scoped memory for tpu_custom_call.1']
    #allocation4 [shape = 's32[1]{0}', space=sflag, size = 0x4, scoped, tag = 'scoped memory for tpu_custom_call.1']
    #allocation5 [shape = 'u8[65536]{0}', space=vmem, size = 0x10000, scoped, tag = 'input window, operand 1, single buffered']
    #allocation6 [shape = 's32[1]{0}', space=sflag, size = 0x4, scoped, tag = 'scoped memory for tpu_custom_call.1']
    #allocation7 [shape = 'u8[65536]{0}', space=vmem, size = 0x10000, scoped, tag = 'output window, operand 0, single buffered']
    %8 = vsyncpa [#allocation3], 0
    %9 = vsyncpa [#allocation6], 0
    %10 = vsyncpa [#allocation4], 0
    // Predicated region
    $region2: #{tpu_custom_call.1} parent=1 // pred_check
      _
    $region3: #{tpu_custom_call.1} parent=1 // pred_check_branch
      %12 = sbr.rel (0) target = $region5
    $region4: #{tpu_custom_call.1} parent=1 // pred_region
      %14 = vsyncadd [#allocation3], 0
      %s15 = sshll.u32 %s0, 4
      %s16 = int_to_ptr.hbm [resolvable:$true] %s15
      %s17 = sshll.u32 [#allocation2], 4
      %s18 = int_to_ptr.vmem [resolvable:$true] %s17
      %23 = dma.hbm_to_vmem [thread:$0]  %s16, 2048, %s18, [#allocation3], 128, 128, 8
    $region5: #{tpu_custom_call.1} parent=1 // pred_fallthru
      _
    // Predicated region
    $region6: #{tpu_custom_call.1} parent=1 // pred_check
      _
    $region7: #{tpu_custom_call.1} parent=1 // pred_check_branch
      %25 = sbr.rel (0) target = $region9
    $region8: #{tpu_custom_call.1} parent=1 // pred_region
      %27 = vsyncadd [#allocation6], 0
      %s28 = sshll.u32 %s1, 4
      %s29 = int_to_ptr.hbm [resolvable:$true] %s28
      %s30 = sshll.u32 [#allocation5], 4
      %s31 = int_to_ptr.vmem [resolvable:$true] %s30
      %36 = dma.hbm_to_vmem [thread:$0]  %s29, 2048, %s31, [#allocation6], 128, 128, 8
    $region9: #{tpu_custom_call.1} parent=1 // pred_fallthru
      _
    // Predicated region
    $region10: #{tpu_custom_call.1} parent=1 // pred_check
      _
    $region11: #{tpu_custom_call.1} parent=1 // pred_check_branch
      %38 = sbr.rel (0) target = $region13
    $region12: #{tpu_custom_call.1} parent=1 // pred_region
      _
    $region13: #{tpu_custom_call.1} parent=1 // pred_fallthru
      _
    // Predicated region
    $region14: #{tpu_custom_call.1} parent=1 // pred_check
      _
    $region15: #{tpu_custom_call.1} parent=1 // pred_check_branch
      %40 = sbr.rel (0) target = $region17
    $region16: #{tpu_custom_call.1} parent=1 // pred_region
      %42 = dma.done [#allocation3], 2048
    $region17: #{tpu_custom_call.1} parent=1 // pred_fallthru
      _
    // Predicated region
    $region18: #{tpu_custom_call.1} parent=1 // pred_check
      _
    $region19: #{tpu_custom_call.1} parent=1 // pred_check_branch
      %44 = sbr.rel (0) target = $region21
    $region20: #{tpu_custom_call.1} parent=1 // pred_region
      %46 = dma.done [#allocation6], 2048
    $region21: #{tpu_custom_call.1} parent=1 // pred_fallthru
      _
    %v47 = vld [vmem:[#allocation2] sm:$0xff]
    %v48 = vld [vmem:[#allocation2 + $0x8] sm:$0xff]
    %v49 = vld [vmem:[#allocation2 + $0x10] sm:$0xff]
    %v50 = vld [vmem:[#allocation2 + $0x18] sm:$0xff]
    %v51 = vld [vmem:[#allocation2 + $0x20] sm:$0xff]
    %v52 = vld [vmem:[#allocation2 + $0x28] sm:$0xff]
    %v53 = vld [vmem:[#allocation2 + $0x30] sm:$0xff]
    %v54 = vld [vmem:[#allocation2 + $0x38] sm:$0xff]
    %v55 = vld [vmem:[#allocation2 + $0x40] sm:$0xff]
    %v56 = vld [vmem:[#allocation2 + $0x48] sm:$0xff]
    %v57 = vld [vmem:[#allocation2 + $0x50] sm:$0xff]
    %v58 = vld [vmem:[#allocation2 + $0x58] sm:$0xff]
    %v59 = vld [vmem:[#allocation2 + $0x60] sm:$0xff]
    %v60 = vld [vmem:[#allocation2 + $0x68] sm:$0xff]
    %v61 = vld [vmem:[#allocation2 + $0x70] sm:$0xff]
    %v62 = vld [vmem:[#allocation2 + $0x78] sm:$0xff]
    %v63 = vld [vmem:[#allocation5] sm:$0xff]
    %v64 = vld [vmem:[#allocation5 + $0x8] sm:$0xff]
    %v65 = vld [vmem:[#allocation5 + $0x10] sm:$0xff]
    %v66 = vld [vmem:[#allocation5 + $0x18] sm:$0xff]
    %v67 = vld [vmem:[#allocation5 + $0x20] sm:$0xff]
    %v68 = vld [vmem:[#allocation5 + $0x28] sm:$0xff]
    %v69 = vld [vmem:[#allocation5 + $0x30] sm:$0xff]
    %v70 = vld [vmem:[#allocation5 + $0x38] sm:$0xff]
    %v71 = vld [vmem:[#allocation5 + $0x40] sm:$0xff]
    %v72 = vld [vmem:[#allocation5 + $0x48] sm:$0xff]
    %v73 = vld [vmem:[#allocation5 + $0x50] sm:$0xff]
    %v74 = vld [vmem:[#allocation5 + $0x58] sm:$0xff]
    %v75 = vld [vmem:[#allocation5 + $0x60] sm:$0xff]
    %v76 = vld [vmem:[#allocation5 + $0x68] sm:$0xff]
    %v77 = vld [vmem:[#allocation5 + $0x70] sm:$0xff]
    %v78 = vld [vmem:[#allocation5 + $0x78] sm:$0xff]
    %v79 = vld [vmem:[%s2] sm:$0x1]
    %v81 = vperm.slane %v79, 0
    %83 = vmatpush.msra.mxu0 %v78
    %84 = vmatpush.msra.mxu0 %v77
    %85 = vmatpush.msra.mxu0 %v76
    %86 = vmatpush.msra.mxu0 %v75
    %87 = vmatpush.msra.mxu0 %v74
    %88 = vmatpush.msra.mxu0 %v73
    %89 = vmatpush.msra.mxu0 %v72
    %90 = vmatpush.msra.mxu0 %v71
    %91 = vmatpush.msra.mxu0 %v70
    %92 = vmatpush.msra.mxu0 %v69
    %93 = vmatpush.msra.mxu0 %v68
    %94 = vmatpush.msra.mxu0 %v67
    %95 = vmatpush.msra.mxu0 %v66
    %96 = vmatpush.msra.mxu0 %v65
    %97 = vmatpush.msra.mxu0 %v64
    %98 = vmatpush.msra.mxu0 %v63
    %99 = vmatmul.f32.gmra.mxu0 %v47
    %v100 = vpop.f32.mrf.mxu0
    %v101 = vadd.f32 %v81, %v100
    %102 = vmatmul.f32.gmra.mxu0 %v48
    %v103 = vpop.f32.mrf.mxu0
    %v104 = vadd.f32 %v81, %v103
    %105 = vmatmul.f32.gmra.mxu0 %v49
    %v106 = vpop.f32.mrf.mxu0
    %v107 = vadd.f32 %v81, %v106
    %108 = vmatmul.f32.gmra.mxu0 %v50
    %v109 = vpop.f32.mrf.mxu0
    %v110 = vadd.f32 %v81, %v109
    %111 = vmatmul.f32.gmra.mxu0 %v51
    %v112 = vpop.f32.mrf.mxu0
    %v113 = vadd.f32 %v81, %v112
    %114 = vmatmul.f32.gmra.mxu0 %v52
    %v115 = vpop.f32.mrf.mxu0
    %v116 = vadd.f32 %v81, %v115
    %117 = vmatmul.f32.gmra.mxu0 %v53
    %v118 = vpop.f32.mrf.mxu0
    %v119 = vadd.f32 %v81, %v118
    %120 = vmatmul.f32.gmra.mxu0 %v54
    %v121 = vpop.f32.mrf.mxu0
    %v122 = vadd.f32 %v81, %v121
    %123 = vmatmul.f32.gmra.mxu0 %v55
    %v124 = vpop.f32.mrf.mxu0
    %v125 = vadd.f32 %v81, %v124
    %126 = vmatmul.f32.gmra.mxu0 %v56
    %v127 = vpop.f32.mrf.mxu0
    %v128 = vadd.f32 %v81, %v127
    %129 = vmatmul.f32.gmra.mxu0 %v57
    %v130 = vpop.f32.mrf.mxu0
    %v131 = vadd.f32 %v81, %v130
    %132 = vmatmul.f32.gmra.mxu0 %v58
    %v133 = vpop.f32.mrf.mxu0
    %v134 = vadd.f32 %v81, %v133
    %135 = vmatmul.f32.gmra.mxu0 %v59
    %v136 = vpop.f32.mrf.mxu0
    %v137 = vadd.f32 %v81, %v136
    %138 = vmatmul.f32.gmra.mxu0 %v60
    %v139 = vpop.f32.mrf.mxu0
    %v140 = vadd.f32 %v81, %v139
    %141 = vmatmul.f32.gmra.mxu0 %v61
    %v142 = vpop.f32.mrf.mxu0
    %v143 = vadd.f32 %v81, %v142
    %144 = vmatmul.f32.gmra.mxu0 %v62
    %v145 = vpop.f32.mrf.mxu0
    %v146 = vadd.f32 %v81, %v145
    %147 = vdwg.mxu0
    %v148 = vmul.f32 %v101, %v101
    %v149 = vmul.f32 %v104, %v104
    %v150 = vmul.f32 %v107, %v107
    %v151 = vmul.f32 %v110, %v110
    %v152 = vmul.f32 %v113, %v113
    %v153 = vmul.f32 %v116, %v116
    %v154 = vmul.f32 %v119, %v119
    %v155 = vmul.f32 %v122, %v122
    %v156 = vmul.f32 %v125, %v125
    %v157 = vmul.f32 %v128, %v128
    %v158 = vmul.f32 %v131, %v131
    %v159 = vmul.f32 %v134, %v134
    %v160 = vmul.f32 %v137, %v137
    %v161 = vmul.f32 %v140, %v140
    %v162 = vmul.f32 %v143, %v143
    %v163 = vmul.f32 %v146, %v146
    %164 = vadd.xlane.f32.xlu0 %v148
    %v165 = vpop.xlane.xlu0 %164
    %166 = vadd.xlane.f32.xlu0 %v149
    %v167 = vpop.xlane.xlu0 %166
    %168 = vadd.xlane.f32.xlu0 %v150
    %v169 = vpop.xlane.xlu0 %168
    %170 = vadd.xlane.f32.xlu0 %v151
    %v171 = vpop.xlane.xlu0 %170
    %172 = vadd.xlane.f32.xlu0 %v152
    %v173 = vpop.xlane.xlu0 %172
    %174 = vadd.xlane.f32.xlu0 %v153
    %v175 = vpop.xlane.xlu0 %174
    %176 = vadd.xlane.f32.xlu0 %v154
    %v177 = vpop.xlane.xlu0 %176
    %178 = vadd.xlane.f32.xlu0 %v155
    %v179 = vpop.xlane.xlu0 %178
    %180 = vadd.xlane.f32.xlu0 %v156
    %v181 = vpop.xlane.xlu0 %180
    %182 = vadd.xlane.f32.xlu0 %v157
    %v183 = vpop.xlane.xlu0 %182
    %184 = vadd.xlane.f32.xlu0 %v158
    %v185 = vpop.xlane.xlu0 %184
    %186 = vadd.xlane.f32.xlu0 %v159
    %v187 = vpop.xlane.xlu0 %186
    %188 = vadd.xlane.f32.xlu0 %v160
    %v189 = vpop.xlane.xlu0 %188
    %190 = vadd.xlane.f32.xlu0 %v161
    %v191 = vpop.xlane.xlu0 %190
    %192 = vadd.xlane.f32.xlu0 %v162
    %v193 = vpop.xlane.xlu0 %192
    %194 = vadd.xlane.f32.xlu0 %v163
    %v195 = vpop.xlane.xlu0 %194
    %v196 = vadd.f32 %v165, 1e-12
    %v197 = vadd.f32 %v167, 1e-12
    %v198 = vadd.f32 %v169, 1e-12
    %v199 = vadd.f32 %v171, 1e-12
    %v200 = vadd.f32 %v173, 1e-12
    %v201 = vadd.f32 %v175, 1e-12
    %v202 = vadd.f32 %v177, 1e-12
    %v203 = vadd.f32 %v179, 1e-12
    %v204 = vadd.f32 %v181, 1e-12
    %v205 = vadd.f32 %v183, 1e-12
    %v206 = vadd.f32 %v185, 1e-12
    %v207 = vadd.f32 %v187, 1e-12
    %v208 = vadd.f32 %v189, 1e-12
    %v209 = vadd.f32 %v191, 1e-12
    %v210 = vadd.f32 %v193, 1e-12
    %v211 = vadd.f32 %v195, 1e-12
    %v212 = vrsqrt.pop %v196
    %v213 = vmul.f32 %v212, %v196
    %v214 = vmul.f32 %v213, %v212
    %v215 = vmul.f32 0.5, %v214
    %v216 = vsub.f32 1.5, %v215
    %v217 = vmul.f32 %v212, %v216
    %vm218 = vweird.f32 %v196
    %vm219 = vweird.f32 %v212
    %vm220 = vmor %vm218, %vm219
    %v221 = vsel %vm220, %v212, %v217
    %v222 = vrsqrt.pop %v197
    %v223 = vmul.f32 %v222, %v197
    %v224 = vmul.f32 %v223, %v222
    %v225 = vmul.f32 0.5, %v224
    %v226 = vsub.f32 1.5, %v225
    %v227 = vmul.f32 %v222, %v226
    %vm228 = vweird.f32 %v197
    %vm229 = vweird.f32 %v222
    %vm230 = vmor %vm228, %vm229
    %v231 = vsel %vm230, %v222, %v227
    %v232 = vrsqrt.pop %v198
    %v233 = vmul.f32 %v232, %v198
    %v234 = vmul.f32 %v233, %v232
    %v235 = vmul.f32 0.5, %v234
    %v236 = vsub.f32 1.5, %v235
    %v237 = vmul.f32 %v232, %v236
    %vm238 = vweird.f32 %v198
    %vm239 = vweird.f32 %v232
    %vm240 = vmor %vm238, %vm239
    %v241 = vsel %vm240, %v232, %v237
    %v242 = vrsqrt.pop %v199
    %v243 = vmul.f32 %v242, %v199
    %v244 = vmul.f32 %v243, %v242
    %v245 = vmul.f32 0.5, %v244
    %v246 = vsub.f32 1.5, %v245
    %v247 = vmul.f32 %v242, %v246
    %vm248 = vweird.f32 %v199
    %vm249 = vweird.f32 %v242
    %vm250 = vmor %vm248, %vm249
    %v251 = vsel %vm250, %v242, %v247
    %v252 = vrsqrt.pop %v200
    %v253 = vmul.f32 %v252, %v200
    %v254 = vmul.f32 %v253, %v252
    %v255 = vmul.f32 0.5, %v254
    %v256 = vsub.f32 1.5, %v255
    %v257 = vmul.f32 %v252, %v256
    %vm258 = vweird.f32 %v200
    %vm259 = vweird.f32 %v252
    %vm260 = vmor %vm258, %vm259
    %v261 = vsel %vm260, %v252, %v257
    %v262 = vrsqrt.pop %v201
    %v263 = vmul.f32 %v262, %v201
    %v264 = vmul.f32 %v263, %v262
    %v265 = vmul.f32 0.5, %v264
    %v266 = vsub.f32 1.5, %v265
    %v267 = vmul.f32 %v262, %v266
    %vm268 = vweird.f32 %v201
    %vm269 = vweird.f32 %v262
    %vm270 = vmor %vm268, %vm269
    %v271 = vsel %vm270, %v262, %v267
    %v272 = vrsqrt.pop %v202
    %v273 = vmul.f32 %v272, %v202
    %v274 = vmul.f32 %v273, %v272
    %v275 = vmul.f32 0.5, %v274
    %v276 = vsub.f32 1.5, %v275
    %v277 = vmul.f32 %v272, %v276
    %vm278 = vweird.f32 %v202
    %vm279 = vweird.f32 %v272
    %vm280 = vmor %vm278, %vm279
    %v281 = vsel %vm280, %v272, %v277
    %v282 = vrsqrt.pop %v203
    %v283 = vmul.f32 %v282, %v203
    %v284 = vmul.f32 %v283, %v282
    %v285 = vmul.f32 0.5, %v284
    %v286 = vsub.f32 1.5, %v285
    %v287 = vmul.f32 %v282, %v286
    %vm288 = vweird.f32 %v203
    %vm289 = vweird.f32 %v282
    %vm290 = vmor %vm288, %vm289
    %v291 = vsel %vm290, %v282, %v287
    %v292 = vrsqrt.pop %v204
    %v293 = vmul.f32 %v292, %v204
    %v294 = vmul.f32 %v293, %v292
    %v295 = vmul.f32 0.5, %v294
    %v296 = vsub.f32 1.5, %v295
    %v297 = vmul.f32 %v292, %v296
    %vm298 = vweird.f32 %v204
    %vm299 = vweird.f32 %v292
    %vm300 = vmor %vm298, %vm299
    %v301 = vsel %vm300, %v292, %v297
    %v302 = vrsqrt.pop %v205
    %v303 = vmul.f32 %v302, %v205
    %v304 = vmul.f32 %v303, %v302
    %v305 = vmul.f32 0.5, %v304
    %v306 = vsub.f32 1.5, %v305
    %v307 = vmul.f32 %v302, %v306
    %vm308 = vweird.f32 %v205
    %vm309 = vweird.f32 %v302
    %vm310 = vmor %vm308, %vm309
    %v311 = vsel %vm310, %v302, %v307
    %v312 = vrsqrt.pop %v206
    %v313 = vmul.f32 %v312, %v206
    %v314 = vmul.f32 %v313, %v312
    %v315 = vmul.f32 0.5, %v314
    %v316 = vsub.f32 1.5, %v315
    %v317 = vmul.f32 %v312, %v316
    %vm318 = vweird.f32 %v206
    %vm319 = vweird.f32 %v312
    %vm320 = vmor %vm318, %vm319
    %v321 = vsel %vm320, %v312, %v317
    %v322 = vrsqrt.pop %v207
    %v323 = vmul.f32 %v322, %v207
    %v324 = vmul.f32 %v323, %v322
    %v325 = vmul.f32 0.5, %v324
    %v326 = vsub.f32 1.5, %v325
    %v327 = vmul.f32 %v322, %v326
    %vm328 = vweird.f32 %v207
    %vm329 = vweird.f32 %v322
    %vm330 = vmor %vm328, %vm329
    %v331 = vsel %vm330, %v322, %v327
    %v332 = vrsqrt.pop %v208
    %v333 = vmul.f32 %v332, %v208
    %v334 = vmul.f32 %v333, %v332
    %v335 = vmul.f32 0.5, %v334
    %v336 = vsub.f32 1.5, %v335
    %v337 = vmul.f32 %v332, %v336
    %vm338 = vweird.f32 %v208
    %vm339 = vweird.f32 %v332
    %vm340 = vmor %vm338, %vm339
    %v341 = vsel %vm340, %v332, %v337
    %v342 = vrsqrt.pop %v209
    %v343 = vmul.f32 %v342, %v209
    %v344 = vmul.f32 %v343, %v342
    %v345 = vmul.f32 0.5, %v344
    %v346 = vsub.f32 1.5, %v345
    %v347 = vmul.f32 %v342, %v346
    %vm348 = vweird.f32 %v209
    %vm349 = vweird.f32 %v342
    %vm350 = vmor %vm348, %vm349
    %v351 = vsel %vm350, %v342, %v347
    %v352 = vrsqrt.pop %v210
    %v353 = vmul.f32 %v352, %v210
    %v354 = vmul.f32 %v353, %v352
    %v355 = vmul.f32 0.5, %v354
    %v356 = vsub.f32 1.5, %v355
    %v357 = vmul.f32 %v352, %v356
    %vm358 = vweird.f32 %v210
    %vm359 = vweird.f32 %v352
    %vm360 = vmor %vm358, %vm359
    %v361 = vsel %vm360, %v352, %v357
    %v362 = vrsqrt.pop %v211
    %v363 = vmul.f32 %v362, %v211
    %v364 = vmul.f32 %v363, %v362
    %v365 = vmul.f32 0.5, %v364
    %v366 = vsub.f32 1.5, %v365
    %v367 = vmul.f32 %v362, %v366
    %vm368 = vweird.f32 %v211
    %vm369 = vweird.f32 %v362
    %vm370 = vmor %vm368, %vm369
    %v371 = vsel %vm370, %v362, %v367
    %v372 = vmul.f32 %v101, %v221
    %v373 = vmul.f32 %v104, %v231
    %v374 = vmul.f32 %v107, %v241
    %v375 = vmul.f32 %v110, %v251
    %v376 = vmul.f32 %v113, %v261
    %v377 = vmul.f32 %v116, %v271
    %v378 = vmul.f32 %v119, %v281
    %v379 = vmul.f32 %v122, %v291
    %v380 = vmul.f32 %v125, %v301
    %v381 = vmul.f32 %v128, %v311
    %v382 = vmul.f32 %v131, %v321
    %v383 = vmul.f32 %v134, %v331
    %v384 = vmul.f32 %v137, %v341
    %v385 = vmul.f32 %v140, %v351
    %v386 = vmul.f32 %v143, %v361
    %v387 = vmul.f32 %v146, %v371
    %388 = vst [vmem:[#allocation7] sm:$0xff] %v372
    %389 = vst [vmem:[#allocation7 + $0x8] sm:$0xff] %v373
    %390 = vst [vmem:[#allocation7 + $0x10] sm:$0xff] %v374
    %391 = vst [vmem:[#allocation7 + $0x18] sm:$0xff] %v375
    %392 = vst [vmem:[#allocation7 + $0x20] sm:$0xff] %v376
    %393 = vst [vmem:[#allocation7 + $0x28] sm:$0xff] %v377
    %394 = vst [vmem:[#allocation7 + $0x30] sm:$0xff] %v378
    %395 = vst [vmem:[#allocation7 + $0x38] sm:$0xff] %v379
    %396 = vst [vmem:[#allocation7 + $0x40] sm:$0xff] %v380
    %397 = vst [vmem:[#allocation7 + $0x48] sm:$0xff] %v381
    %398 = vst [vmem:[#allocation7 + $0x50] sm:$0xff] %v382
    %399 = vst [vmem:[#allocation7 + $0x58] sm:$0xff] %v383
    %400 = vst [vmem:[#allocation7 + $0x60] sm:$0xff] %v384
    %401 = vst [vmem:[#allocation7 + $0x68] sm:$0xff] %v385
    %402 = vst [vmem:[#allocation7 + $0x70] sm:$0xff] %v386
    %403 = vst [vmem:[#allocation7 + $0x78] sm:$0xff] %v387
    // Predicated region
    $region22: #{tpu_custom_call.1} parent=1 // pred_check
      _
    $region23: #{tpu_custom_call.1} parent=1 // pred_check_branch
      %405 = sbr.rel (0) target = $region25
    $region24: #{tpu_custom_call.1} parent=1 // pred_region
      %407 = vsyncadd [#allocation4], 0
      %s408 = sshll.u32 [#allocation7], 4
      %s409 = int_to_ptr.vmem [resolvable:$true] %s408
      %s410 = sshll.u32 %s3, 4
      %s411 = int_to_ptr.hbm [resolvable:$true] %s410
      %416 = dma.vmem_to_hbm [thread:$0]  %s409, 2048, %s411, [#allocation4], 128, 128, 8
    $region25: #{tpu_custom_call.1} parent=1 // pred_fallthru
      _
    // Predicated region
    $region26: #{tpu_custom_call.1} parent=1 // pred_check
      _
    $region27: #{tpu_custom_call.1} parent=1 // pred_check_branch
      %418 = sbr.rel (0) target = $region29
    $region28: #{tpu_custom_call.1} parent=1 // pred_region
      %420 = dma.done [#allocation4], 2048
    $region29: #{tpu_custom_call.1} parent=1 // pred_fallthru
      _
    %421 = vsyncpa [#allocation3], 1
    %422 = vsyncpa [#allocation6], 1
    %423 = vsyncpa [#allocation4], 1

</llo_original>
